<compile_context>
chip_gen: v7x
topology: tpu7x:2x2x1
jax: 0.10.0
libtpu: 0.0.40
codegen_flags: <defaults>
</compile_context>

<pallas_src>
import jax
import jax.numpy as jnp
from jax.experimental import pallas as pl
from jax.experimental.pallas import tpu as pltpu

HID1 = 512
HID2 = 128
LANE = 128
SUBLANE = 8
_MEGACORE_MIN_BATCH = 128  # below this, don't bother splitting across TensorCores


def _round_up(x, m):
    return ((x + m - 1) // m) * m


def _num_tensorcores():
    """Best-effort TensorCores-per-chip (megacore / v7x chips expose 2)."""
    try:
        kind = getattr(jax.devices()[0], "device_kind", "").lower()
    except Exception:
        return 1
    return 2 if any(tag in kind for tag in ("v7", "v5p", "v4")) else 1


def _select_batch_tile(batch, num_cores, max_tile):
    """Pick a batch tile that (a) keeps the grid short on 1-TC chips, (b) splits
    evenly across TCs on megacore chips, (c) bounds batch padding to a few rows."""
    b8 = _round_up(max(batch, 1), SUBLANE)
    steps = pl.cdiv(b8, max_tile)
    if num_cores > 1 and b8 >= _MEGACORE_MIN_BATCH:
        steps = _round_up(max(steps, num_cores), num_cores)
    return _round_up(pl.cdiv(b8, steps), SUBLANE)


def actor_kernel(obs_ref, w1_ref, b1_ref, w2_ref, b2_ref, w3_ref, b3_ref, out_ref):
    # Hot path: 3 MXU matmuls (weight dtype operands, f32 accumulate) + VPU bias/relu
    # + EUP tanh. All weights/biases are VMEM-resident (constant block index).
    x = obs_ref[...]
    wdt = w1_ref.dtype
    h1 = jnp.dot(x.astype(wdt), w1_ref[...], preferred_element_type=jnp.float32)
    h1 = jnp.maximum(h1 + b1_ref[...], 0.0)
    h2 = jnp.dot(h1.astype(wdt), w2_ref[...], preferred_element_type=jnp.float32)
    h2 = jnp.maximum(h2 + b2_ref[...], 0.0)
    h3 = jnp.dot(h2.astype(wdt), w3_ref[...], preferred_element_type=jnp.float32)
    out_ref[...] = jnp.tanh(h3 + b3_ref[...]).astype(out_ref.dtype)


def actor_forward(obs, params, *, action_dim=None, batch_tile=None,
                  max_batch_tile=2048, out_dtype=jnp.float32, num_cores=None,
                  vmem_limit_bytes=32 * 1024 * 1024):
    """Fused Actor forward.

    obs: [B, obs_dim] float32.
    params: dict with w1,b1,w2,b2,w3,b3; weights [in, out] (f32 or bf16), biases f32
      [1, out]. w3/b3 should be lane-padded (init_actor_params does this once).
    action_dim: true (unpadded) output width; defaults to w3.shape[1].
    out_dtype: float32 (exact PyTorch semantics) or bfloat16 (halves output HBM bytes).
    """
    B, obs_dim = obs.shape
    w3, b3 = params["w3"], params["b3"]
    if action_dim is None:
        action_dim = w3.shape[1]
    n_pad = _round_up(w3.shape[1], LANE)
    if w3.shape[1] != n_pad:
        # Slow fallback for un-prepared params; prefer init_actor_params (pre-padded).
        w3 = jnp.pad(w3, ((0, 0), (0, n_pad - w3.shape[1])))
        b3 = jnp.pad(b3, ((0, 0), (0, n_pad - b3.shape[1])))

    if num_cores is None:
        num_cores = _num_tensorcores()
    if batch_tile is None:
        batch_tile = _select_batch_tile(B, num_cores, max_batch_tile)
    batch_tile = _round_up(batch_tile, SUBLANE)
    grid = (pl.cdiv(B, batch_tile),)
    work_rows = grid[0] * batch_tile  # includes the (small) overhang of the last block

    w_bytes = jnp.dtype(params["w1"].dtype).itemsize
    flops = 2 * work_rows * (obs_dim * HID1 + HID1 * HID2 + HID2 * n_pad)
    bytes_accessed = (
        B * obs_dim * jnp.dtype(obs.dtype).itemsize                 # obs in
        + B * n_pad * jnp.dtype(out_dtype).itemsize                 # out
        + (obs_dim * HID1 + HID1 * HID2 + HID2 * n_pad) * w_bytes   # weights
        + (HID1 + HID2 + n_pad) * 4                                 # biases
    )
    cost = pl.CostEstimate(flops=flops, transcendentals=work_rows * n_pad,
                           bytes_accessed=bytes_accessed)

    # Weights/biases: constant block index -> VMEM-resident across grid steps.
    full = lambda shape: pl.BlockSpec(shape, lambda i: (0, 0))

    out = pl.pallas_call(
        actor_kernel,
        out_shape=jax.ShapeDtypeStruct((B, n_pad), out_dtype),
        grid_spec=pltpu.PrefetchScalarGridSpec(
            num_scalar_prefetch=0,
            grid=grid,
            in_specs=[
                pl.BlockSpec((batch_tile, obs_dim), lambda i: (i, 0)),  # obs tile
                full((obs_dim, HID1)),   # w1
                full((1, HID1)),         # b1
                full((HID1, HID2)),      # w2
                full((1, HID2)),         # b2
                full((HID2, n_pad)),     # w3 (lane-padded)
                full((1, n_pad)),        # b3 (lane-padded)
            ],
            out_specs=pl.BlockSpec((batch_tile, n_pad), lambda i: (i, 0)),
        ),
        compiler_params=pltpu.CompilerParams(
            dimension_semantics=("parallel",),
            vmem_limit_bytes=vmem_limit_bytes,
        ),
        cost_estimate=cost,
    )(obs, params["w1"], params["b1"], params["w2"], params["b2"], w3, b3)

    return out[:, :action_dim] if n_pad != action_dim else out


def init_actor_params(key, obs_dim, action_dim, dtype=jnp.float32):
    """Uniform init like PyTorch's default Linear (bound = 1/sqrt(fan_in)).

    Weights are cast to `dtype` (bf16 recommended on v6e/v7x, f32 on v5e); biases stay
    float32. The output layer is lane-padded to a multiple of 128 ONCE here so the
    per-call forward path launches no pad ops.
    """
    ks = jax.random.split(key, 6)

    def linear(kw, kb, fan_in, fan_out):
        bound = 1.0 / jnp.sqrt(fan_in)
        w = jax.random.uniform(kw, (fan_in, fan_out), jnp.float32, -bound, bound)
        b = jax.random.uniform(kb, (1, fan_out), jnp.float32, -bound, bound)
        return w.astype(dtype), b

    w1, b1 = linear(ks[0], ks[1], obs_dim, HID1)
    w2, b2 = linear(ks[2], ks[3], HID1, HID2)
    w3, b3 = linear(ks[4], ks[5], HID2, action_dim)
    n_pad = _round_up(action_dim, LANE)
    if n_pad != action_dim:
        w3 = jnp.pad(w3, ((0, 0), (0, n_pad - action_dim)))
        b3 = jnp.pad(b3, ((0, 0), (0, n_pad - action_dim)))
    return {"w1": w1, "b1": b1, "w2": w2, "b2": b2, "w3": w3, "b3": b3}


def actor_forward_ref(obs, p, action_dim=None):
    """Pure-JAX f32 reference (upcasts weights if stored in bf16)."""
    f32 = lambda a: a.astype(jnp.float32)
    x = jnp.maximum(obs @ f32(p["w1"]) + p["b1"], 0.0)
    x = jnp.maximum(x @ f32(p["w2"]) + p["b2"], 0.0)
    y = jnp.tanh(x @ f32(p["w3"]) + p["b3"])
    return y if action_dim is None else y[:, :action_dim]


if __name__ == "__main__":
    key = jax.random.PRNGKey(0)
    k_obs, k_params, k_obs2, k_obs3 = jax.random.split(key, 4)

    batch, obs_dim, action_dim = 8, 32, 8
    obs = jax.random.normal(k_obs, (batch, obs_dim), jnp.float32)

    # 1) f32 weights, f32 output: exact check against the reference.
    params_f32 = init_actor_params(k_params, obs_dim, action_dim, dtype=jnp.float32)
    out = jax.block_until_ready(actor_forward(obs, params_f32, action_dim=action_dim))
    ref = actor_forward_ref(obs, params_f32, action_dim)
    assert out.shape == (batch, action_dim) and out.dtype == jnp.float32
    assert jnp.allclose(out, ref, atol=1e-5, rtol=1e-5), "f32 path mismatch"

    # 2) bf16 weights + bf16 output: the bandwidth configuration for v6e/v7x.
    params_bf16 = init_actor_params(k_params, obs_dim, action_dim, dtype=jnp.bfloat16)
    out_bf16 = jax.block_until_ready(
        actor_forward(obs, params_bf16, action_dim=action_dim, out_dtype=jnp.bfloat16))
    ref_bf16 = actor_forward_ref(obs, params_bf16, action_dim)
    assert out_bf16.dtype == jnp.bfloat16
    assert jnp.allclose(out_bf16.astype(jnp.float32), ref_bf16,
                        atol=5e-2, rtol=5e-2), "bf16 path mismatch"

    # 3) Ragged batch with a forced small tile: grid=(4,), last block overhangs
    #    (reads garbage rows, masked writeback) -- no jnp.pad anywhere.
    obs_big = jax.random.normal(k_obs2, (50, obs_dim), jnp.float32)
    out_big = jax.block_until_ready(
        actor_forward(obs_big, params_f32, action_dim=action_dim, batch_tile=16))
    ref_big = actor_forward_ref(obs_big, params_f32, action_dim)
    assert out_big.shape == (50, action_dim)
    assert jnp.allclose(out_big, ref_big, atol=1e-5, rtol=1e-5), "ragged path mismatch"

    # 4) Default (auto) tile selection on a non-multiple-of-8 batch.
    obs_mid = jax.random.normal(k_obs3, (130, obs_dim), jnp.float32)
    out_mid = jax.block_until_ready(
        actor_forward(obs_mid, params_f32, action_dim=action_dim))
    ref_mid = actor_forward_ref(obs_mid, params_f32, action_dim)
    assert out_mid.shape == (130, action_dim)
    assert jnp.allclose(out_mid, ref_mid, atol=1e-5, rtol=1e-5), "auto-tile mismatch"

    print("KERNEL_OK")
</pallas_src>

<mosaic_0001>
module attributes {stable_mosaic.version = 11 : i64} {
  func.func @actor_kernel(%arg0: i32, %arg1: memref<8x32xf32, #tpu.memory_space<vmem>>, %arg2: memref<32x512xf32, #tpu.memory_space<vmem>>, %arg3: memref<1x512xf32, #tpu.memory_space<vmem>>, %arg4: memref<512x128xf32, #tpu.memory_space<vmem>>, %arg5: memref<1x128xf32, #tpu.memory_space<vmem>>, %arg6: memref<128x128xf32, #tpu.memory_space<vmem>>, %arg7: memref<1x128xf32, #tpu.memory_space<vmem>>, %arg8: memref<8x128xf32, #tpu.memory_space<vmem>>) attributes {dimension_semantics = [#tpu.dimension_semantics<parallel>], iteration_bounds = array<i64: 1>, scalar_prefetch = 0 : i64, scratch_operands = 0 : i64, tpu.core_type = #tpu.core_type<tc>, window_params = [{transform_indices = @transform_0, window_bounds = array<i64: 8, 32>}, {pipeline_mode = #tpu.pipeline_mode<synchronous>, transform_indices = @transform_1, window_bounds = array<i64: 32, 512>}, {pipeline_mode = #tpu.pipeline_mode<synchronous>, transform_indices = @transform_2, window_bounds = array<i64: 1, 512>}, {pipeline_mode = #tpu.pipeline_mode<synchronous>, transform_indices = @transform_3, window_bounds = array<i64: 512, 128>}, {pipeline_mode = #tpu.pipeline_mode<synchronous>, transform_indices = @transform_4, window_bounds = array<i64: 1, 128>}, {pipeline_mode = #tpu.pipeline_mode<synchronous>, transform_indices = @transform_5, window_bounds = array<i64: 128, 128>}, {pipeline_mode = #tpu.pipeline_mode<synchronous>, transform_indices = @transform_6, window_bounds = array<i64: 1, 128>}, {transform_indices = @transform_7, window_bounds = array<i64: 8, 128>}]} {
    %c0 = arith.constant 0 : index
    %c0_0 = arith.constant 0 : index
    %0 = vector.load %arg1[%c0, %c0_0] : memref<8x32xf32, #tpu.memory_space<vmem>>, vector<8x32xf32>
    %c0_1 = arith.constant 0 : index
    %c0_2 = arith.constant 0 : index
    %1 = vector.load %arg2[%c0_1, %c0_2] : memref<32x512xf32, #tpu.memory_space<vmem>>, vector<32x512xf32>
    %cst = arith.constant dense<0.000000e+00> : vector<8x512xf32>
    %2 = tpu.matmul %0, %1, %cst {dimension_numbers = #tpu.dot_dimension_numbers<[1], [0], [0], [1], [0, 0, 1, 1], [], []>} : vector<8x32xf32>, vector<32x512xf32>, vector<8x512xf32> -> vector<8x512xf32>
    %c0_3 = arith.constant 0 : index
    %c0_4 = arith.constant 0 : index
    %3 = vector.load %arg3[%c0_3, %c0_4] : memref<1x512xf32, #tpu.memory_space<vmem>>, vector<1x512xf32>
    %4 = vector.broadcast %3 : vector<1x512xf32> to vector<8x512xf32>
    %5 = arith.addf %2, %4 : vector<8x512xf32>
    %cst_5 = arith.constant 0.000000e+00 : f32
    %6 = vector.broadcast %cst_5 : f32 to vector<8x512xf32>
    %7 = arith.maximumf %5, %6 : vector<8x512xf32>
    %c0_6 = arith.constant 0 : index
    %c0_7 = arith.constant 0 : index
    %8 = vector.load %arg4[%c0_6, %c0_7] : memref<512x128xf32, #tpu.memory_space<vmem>>, vector<512x128xf32>
    %cst_8 = arith.constant dense<0.000000e+00> : vector<8x128xf32>
    %9 = tpu.matmul %7, %8, %cst_8 {dimension_numbers = #tpu.dot_dimension_numbers<[1], [0], [0], [1], [0, 0, 1, 1], [], []>} : vector<8x512xf32>, vector<512x128xf32>, vector<8x128xf32> -> vector<8x128xf32>
    %c0_9 = arith.constant 0 : index
    %c0_10 = arith.constant 0 : index
    %10 = vector.load %arg5[%c0_9, %c0_10] : memref<1x128xf32, #tpu.memory_space<vmem>>, vector<1x128xf32>
    %11 = vector.broadcast %10 : vector<1x128xf32> to vector<8x128xf32>
    %12 = arith.addf %9, %11 : vector<8x128xf32>
    %cst_11 = arith.constant 0.000000e+00 : f32
    %13 = vector.broadcast %cst_11 : f32 to vector<8x128xf32>
    %14 = arith.maximumf %12, %13 : vector<8x128xf32>
    %c0_12 = arith.constant 0 : index
    %c0_13 = arith.constant 0 : index
    %15 = vector.load %arg6[%c0_12, %c0_13] : memref<128x128xf32, #tpu.memory_space<vmem>>, vector<128x128xf32>
    %cst_14 = arith.constant dense<0.000000e+00> : vector<8x128xf32>
    %16 = tpu.matmul %14, %15, %cst_14 {dimension_numbers = #tpu.dot_dimension_numbers<[1], [0], [0], [1], [0, 0, 1, 1], [], []>} : vector<8x128xf32>, vector<128x128xf32>, vector<8x128xf32> -> vector<8x128xf32>
    %c0_15 = arith.constant 0 : index
    %c0_16 = arith.constant 0 : index
    %17 = vector.load %arg7[%c0_15, %c0_16] : memref<1x128xf32, #tpu.memory_space<vmem>>, vector<1x128xf32>
    %18 = vector.broadcast %17 : vector<1x128xf32> to vector<8x128xf32>
    %19 = arith.addf %16, %18 : vector<8x128xf32>
    %20 = math.tanh %19 : vector<8x128xf32>
    %c0_17 = arith.constant 0 : index
    %c0_18 = arith.constant 0 : index
    %21 = vector.load %arg8[%c0_17, %c0_18] : memref<8x128xf32, #tpu.memory_space<vmem>>, vector<8x128xf32>
    tpu.vector_store %arg8[%c0_17, %c0_18], %20 {strides = array<i32>} : memref<8x128xf32, #tpu.memory_space<vmem>>, vector<8x128xf32>,
    return
  }
  func.func @transform_0(%arg0: i32) -> (i32, i32) {
    %c0_i32 = arith.constant 0 : i32
    %c0_i32_0 = arith.constant 0 : i32
    return %arg0, %c0_i32 : i32, i32
  }
  func.func @transform_1(%arg0: i32) -> (i32, i32) {
    %c0_i32 = arith.constant 0 : i32
    %c0_i32_0 = arith.constant 0 : i32
    %c0_i32_1 = arith.constant 0 : i32
    return %c0_i32, %c0_i32_0 : i32, i32
  }
  func.func @transform_2(%arg0: i32) -> (i32, i32) {
    %c0_i32 = arith.constant 0 : i32
    %c0_i32_0 = arith.constant 0 : i32
    %c0_i32_1 = arith.constant 0 : i32
    return %c0_i32, %c0_i32_0 : i32, i32
  }
  func.func @transform_3(%arg0: i32) -> (i32, i32) {
    %c0_i32 = arith.constant 0 : i32
    %c0_i32_0 = arith.constant 0 : i32
    %c0_i32_1 = arith.constant 0 : i32
    return %c0_i32, %c0_i32_0 : i32, i32
  }
  func.func @transform_4(%arg0: i32) -> (i32, i32) {
    %c0_i32 = arith.constant 0 : i32
    %c0_i32_0 = arith.constant 0 : i32
    %c0_i32_1 = arith.constant 0 : i32
    return %c0_i32, %c0_i32_0 : i32, i32
  }
  func.func @transform_5(%arg0: i32) -> (i32, i32) {
    %c0_i32 = arith.constant 0 : i32
    %c0_i32_0 = arith.constant 0 : i32
    %c0_i32_1 = arith.constant 0 : i32
    return %c0_i32, %c0_i32_0 : i32, i32
  }
  func.func @transform_6(%arg0: i32) -> (i32, i32) {
    %c0_i32 = arith.constant 0 : i32
    %c0_i32_0 = arith.constant 0 : i32
    %c0_i32_1 = arith.constant 0 : i32
    return %c0_i32, %c0_i32_0 : i32, i32
  }
  func.func @transform_7(%arg0: i32) -> (i32, i32) {
    %c0_i32 = arith.constant 0 : i32
    %c0_i32_0 = arith.constant 0 : i32
    return %arg0, %c0_i32 : i32, i32
  }
}

</mosaic_0001>

<llo_original>
// kernel: tpu_custom_call.1
$region0: #{tpu_custom_call.1}
  #allocation0 [shape = 'u32[]', space=smem, size = 0x4, offset = 0x4, fixed_abs, tag = 'smem constant byte address 0x4 - core index']
  #allocation1 [shape = 'u32[144,128]{1,0:T(1,128)}', space=vmem, size = 0x12000, scoped, tag = 'internal scratch']
  %s0 = inlined_call_operand.hbm [shape: f32[8,32], index: 0, kind: input, shape index: {}]
  %s1 = inlined_call_operand.hbm [shape: f32[32,512], index: 1, kind: input, shape index: {}]
  %s2 = inlined_call_operand.vmem [shape: f32[1,512], index: 2, kind: input, shape index: {}]
  %s3 = inlined_call_operand.hbm [shape: f32[512,128], index: 3, kind: input, shape index: {}]
  %s4 = inlined_call_operand.vmem [shape: f32[1,128], index: 4, kind: input, shape index: {}]
  %s5 = inlined_call_operand.hbm [shape: f32[128,128], index: 5, kind: input, shape index: {}]
  %s6 = inlined_call_operand.vmem [shape: f32[1,128], index: 6, kind: input, shape index: {}]
  %s7 = inlined_call_operand.hbm [shape: f32[8,128], index: 7, kind: output, shape index: {}]
  %s8 = sld [smem:[#allocation0]]
  $region54: #{tpu_custom_call.1} parent=0
    _
  %s10 = ssub.s32 1, %s8
  %s11 = scalar_select 0, %s10, %s8
  $region1: #{tpu_custom_call.1} parent=0
    #allocation2 [shape = 'u8[4096]{0}', space=vmem, size = 0x1000, scoped, tag = 'input window, operand 0, single buffered']
    #allocation3 [shape = 's32[1]{0}', space=sflag, size = 0x4, scoped, tag = 'scoped memory for tpu_custom_call.1']
    #allocation4 [shape = 's32[1]{0}', space=sflag, size = 0x4, scoped, tag = 'scoped memory for tpu_custom_call.1']
    #allocation5 [shape = 'u8[65536]{0}', space=vmem, size = 0x10000, scoped, tag = 'input window, operand 1, single buffered']
    #allocation6 [shape = 's32[1]{0}', space=sflag, size = 0x4, scoped, tag = 'scoped memory for tpu_custom_call.1']
    #allocation7 [shape = 'u8[262144]{0}', space=vmem, size = 0x40000, scoped, tag = 'input window, operand 3, single buffered']
    #allocation8 [shape = 'u8[65536]{0}', space=vmem, size = 0x10000, scoped, tag = 'input window, operand 5, single buffered']
    #allocation9 [shape = 's32[1]{0}', space=sflag, size = 0x4, scoped, tag = 'scoped memory for tpu_custom_call.1']
    #allocation10 [shape = 'u8[4096]{0}', space=vmem, size = 0x1000, scoped, tag = 'output window, operand 0, single buffered']
    %12 = vsyncpa [#allocation3], 0
    %13 = vsyncpa [#allocation6], 0
    %14 = vsyncpa [#allocation9], 0
    %15 = vsyncpa [#allocation4], 0
    // Predicated region
    $region2: #{tpu_custom_call.1} parent=1 // pred_check
      _
    $region3: #{tpu_custom_call.1} parent=1 // pred_check_branch
      %17 = sbr.rel (0) target = $region5
    $region4: #{tpu_custom_call.1} parent=1 // pred_region
      %s19 = ssub.s32 128, 128
      %20 = vsyncadd [#allocation3], %s19
      %s22 = sshll.u32 [#allocation2], 4
      %s23 = int_to_ptr.vmem [resolvable:$true] %s22
      %25 = dma.hbm_to_vmem [thread:$0]  %s0, 128, %s23, [#allocation3]
    $region5: #{tpu_custom_call.1} parent=1 // pred_fallthru
      _
    // Predicated region
    $region6: #{tpu_custom_call.1} parent=1 // pred_check
      _
    $region7: #{tpu_custom_call.1} parent=1 // pred_check_branch
      %27 = sbr.rel (0) target = $region9
    $region8: #{tpu_custom_call.1} parent=1 // pred_region
      %s29 = ssub.s32 2048, 2048
      %30 = vsyncadd [#allocation6], %s29
      %s31 = sshll.u32 [#allocation5], 4
      %s32 = int_to_ptr.vmem [resolvable:$true] %s31
      %37 = dma.hbm_to_vmem [thread:$0]  %s1, 2048, %s32, [#allocation6], 512, 512, 32
    $region9: #{tpu_custom_call.1} parent=1 // pred_fallthru
      _
    // Predicated region
    $region10: #{tpu_custom_call.1} parent=1 // pred_check
      _
    $region11: #{tpu_custom_call.1} parent=1 // pred_check_branch
      %39 = sbr.rel (0) target = $region13
    $region12: #{tpu_custom_call.1} parent=1 // pred_region
      _
    $region13: #{tpu_custom_call.1} parent=1 // pred_fallthru
      _
    // Predicated region
    $region14: #{tpu_custom_call.1} parent=1 // pred_check
      _
    $region15: #{tpu_custom_call.1} parent=1 // pred_check_branch
      %41 = sbr.rel (0) target = $region17
    $region16: #{tpu_custom_call.1} parent=1 // pred_region
      %s43 = ssub.s32 8192, 8192
      %44 = vsyncadd [#allocation6], %s43
      %s45 = sshll.u32 [#allocation7], 4
      %s46 = int_to_ptr.vmem [resolvable:$true] %s45
      %51 = dma.hbm_to_vmem [thread:$0]  %s3, 8192, %s46, [#allocation6], 128, 128, 8
    $region17: #{tpu_custom_call.1} parent=1 // pred_fallthru
      _
    // Predicated region
    $region18: #{tpu_custom_call.1} parent=1 // pred_check
      _
    $region19: #{tpu_custom_call.1} parent=1 // pred_check_branch
      %53 = sbr.rel (0) target = $region21
    $region20: #{tpu_custom_call.1} parent=1 // pred_region
      _
    $region21: #{tpu_custom_call.1} parent=1 // pred_fallthru
      _
    // Predicated region
    $region22: #{tpu_custom_call.1} parent=1 // pred_check
      _
    $region23: #{tpu_custom_call.1} parent=1 // pred_check_branch
      %55 = sbr.rel (0) target = $region25
    $region24: #{tpu_custom_call.1} parent=1 // pred_region
      %s57 = ssub.s32 2048, 2048
      %58 = vsyncadd [#allocation9], %s57
      %s59 = sshll.u32 [#allocation8], 4
      %s60 = int_to_ptr.vmem [resolvable:$true] %s59
      %65 = dma.hbm_to_vmem [thread:$0]  %s5, 2048, %s60, [#allocation9], 128, 128, 8
    $region25: #{tpu_custom_call.1} parent=1 // pred_fallthru
      _
    // Predicated region
    $region26: #{tpu_custom_call.1} parent=1 // pred_check
      _
    $region27: #{tpu_custom_call.1} parent=1 // pred_check_branch
      %67 = sbr.rel (0) target = $region29
    $region28: #{tpu_custom_call.1} parent=1 // pred_region
      _
    $region29: #{tpu_custom_call.1} parent=1 // pred_fallthru
      _
    // Predicated region
    $region30: #{tpu_custom_call.1} parent=1 // pred_check
      _
    $region31: #{tpu_custom_call.1} parent=1 // pred_check_branch
      %69 = sbr.rel (0) target = $region33
    $region32: #{tpu_custom_call.1} parent=1 // pred_region
      %70 = dma.done [#allocation3], 128
    $region33: #{tpu_custom_call.1} parent=1 // pred_fallthru
      _
    // Predicated region
    $region34: #{tpu_custom_call.1} parent=1 // pred_check
      _
    $region35: #{tpu_custom_call.1} parent=1 // pred_check_branch
      %72 = sbr.rel (0) target = $region37
    $region36: #{tpu_custom_call.1} parent=1 // pred_region
      %73 = dma.done [#allocation6], 2048
    $region37: #{tpu_custom_call.1} parent=1 // pred_fallthru
      _
    // Predicated region
    $region38: #{tpu_custom_call.1} parent=1 // pred_check
      _
    $region39: #{tpu_custom_call.1} parent=1 // pred_check_branch
      %75 = sbr.rel (0) target = $region41
    $region40: #{tpu_custom_call.1} parent=1 // pred_region
      %76 = dma.done [#allocation6], 8192
    $region41: #{tpu_custom_call.1} parent=1 // pred_fallthru
      _
    // Predicated region
    $region42: #{tpu_custom_call.1} parent=1 // pred_check
      _
    $region43: #{tpu_custom_call.1} parent=1 // pred_check_branch
      %78 = sbr.rel (0) target = $region45
    $region44: #{tpu_custom_call.1} parent=1 // pred_region
      %79 = dma.done [#allocation9], 2048
    $region45: #{tpu_custom_call.1} parent=1 // pred_fallthru
      _
    %v80 = vld [vmem:[#allocation2] sm:$0xff]
    %v81 = vld [vmem:[#allocation5] sm:$0xff]
    %v82 = vld [vmem:[#allocation5 + $0x8] sm:$0xff]
    %v83 = vld [vmem:[#allocation5 + $0x10] sm:$0xff]
    %v84 = vld [vmem:[#allocation5 + $0x18] sm:$0xff]
    %v85 = vld [vmem:[#allocation5 + $0x20] sm:$0xff]
    %v86 = vld [vmem:[#allocation5 + $0x28] sm:$0xff]
    %v87 = vld [vmem:[#allocation5 + $0x30] sm:$0xff]
    %v88 = vld [vmem:[#allocation5 + $0x38] sm:$0xff]
    %v89 = vld [vmem:[#allocation5 + $0x40] sm:$0xff]
    %v90 = vld [vmem:[#allocation5 + $0x48] sm:$0xff]
    %v91 = vld [vmem:[#allocation5 + $0x50] sm:$0xff]
    %v92 = vld [vmem:[#allocation5 + $0x58] sm:$0xff]
    %v93 = vld [vmem:[#allocation5 + $0x60] sm:$0xff]
    %v94 = vld [vmem:[#allocation5 + $0x68] sm:$0xff]
    %v95 = vld [vmem:[#allocation5 + $0x70] sm:$0xff]
    %v96 = vld [vmem:[#allocation5 + $0x78] sm:$0xff]
    %v97 = vld [vmem:[%s2] sm:$0xf]
    %v99 = vlaneseq
    %v100 = vshrl.u32 %v99, 7
    %v101 = vsub.s32 0, %v100
    %v102 = vrot.slane %v97, %v101
    %v103 = vlaneseq
    %v104 = vshrl.u32 %v103, 7
    %v105 = vsub.s32 1, %v104
    %v106 = vrot.slane %v97, %v105
    %v107 = vlaneseq
    %v108 = vshrl.u32 %v107, 7
    %v109 = vsub.s32 2, %v108
    %v110 = vrot.slane %v97, %v109
    %v111 = vlaneseq
    %v112 = vshrl.u32 %v111, 7
    %v113 = vsub.s32 3, %v112
    %v114 = vrot.slane %v97, %v113
    %vm119 = vcmask 261120
    %v121 = vsel %vm119, %v80, 0
    %123 = vmatprep.subr.mxu0 %v82
    %124 = vmatpush1.msra.mxu0 %v81
    %125 = vmatprep.subr.mxu0 %v86
    %126 = vmatpush1.msra.mxu0 %v85
    %127 = vmatprep.subr.mxu0 %v90
    %128 = vmatpush1.msra.mxu0 %v89
    %129 = vmatprep.subr.mxu0 %v94
    %130 = vmatpush1.msra.mxu0 %v93
    %131 = vmatprep.subr.mxu0 0.0
    %132 = vmatpush1.msra.mxu0 0.0
    %133 = vmatprep.subr.mxu0 0.0
    %134 = vmatpush1.msra.mxu0 0.0
    %135 = vmatprep.subr.mxu0 0.0
    %136 = vmatpush1.msra.mxu0 0.0
    %137 = vmatprep.subr.mxu0 0.0
    %138 = vmatpush1.msra.mxu0 0.0
    %139 = vmatprep.subr.mxu0 0.0
    %140 = vmatpush1.msra.mxu0 0.0
    %141 = vmatprep.subr.mxu0 0.0
    %142 = vmatpush1.msra.mxu0 0.0
    %143 = vmatprep.subr.mxu0 0.0
    %144 = vmatpush1.msra.mxu0 0.0
    %145 = vmatprep.subr.mxu0 0.0
    %146 = vmatpush1.msra.mxu0 0.0
    %147 = vmatprep.subr.mxu0 0.0
    %148 = vmatpush1.msra.mxu0 0.0
    %149 = vmatprep.subr.mxu0 0.0
    %150 = vmatpush1.msra.mxu0 0.0
    %151 = vmatprep.subr.mxu0 0.0
    %152 = vmatpush1.msra.mxu0 0.0
    %153 = vmatprep.subr.mxu0 0.0
    %154 = vmatpush1.msra.mxu0 0.0
    %155 = vmatprep.subr.mxu0 0.0
    %156 = vmatpush1.msra.mxu0 0.0
    %157 = vmatprep.subr.mxu0 0.0
    %158 = vmatpush1.msra.mxu0 0.0
    %159 = vmatprep.subr.mxu0 0.0
    %160 = vmatpush1.msra.mxu0 0.0
    %161 = vmatprep.subr.mxu0 0.0
    %162 = vmatpush1.msra.mxu0 0.0
    %163 = vmatprep.subr.mxu0 0.0
    %164 = vmatpush1.msra.mxu0 0.0
    %165 = vmatprep.subr.mxu0 0.0
    %166 = vmatpush1.msra.mxu0 0.0
    %167 = vmatprep.subr.mxu0 0.0
    %168 = vmatpush1.msra.mxu0 0.0
    %169 = vmatprep.subr.mxu0 0.0
    %170 = vmatpush1.msra.mxu0 0.0
    %171 = vmatprep.subr.mxu0 0.0
    %172 = vmatpush1.msra.mxu0 0.0
    %173 = vmatprep.subr.mxu0 0.0
    %174 = vmatpush1.msra.mxu0 0.0
    %175 = vmatprep.subr.mxu0 0.0
    %176 = vmatpush1.msra.mxu0 0.0
    %177 = vmatprep.subr.mxu0 0.0
    %178 = vmatpush1.msra.mxu0 0.0
    %179 = vmatprep.subr.mxu0 0.0
    %180 = vmatpush1.msra.mxu0 0.0
    %181 = vmatprep.subr.mxu0 0.0
    %182 = vmatpush1.msra.mxu0 0.0
    %183 = vmatprep.subr.mxu0 0.0
    %184 = vmatpush1.msra.mxu0 0.0
    %185 = vmatprep.subr.mxu0 0.0
    %186 = vmatpush1.msra.mxu0 0.0
    %187 = vmatprep.mubr.f32.mxu0 0.0
    %188 = vmatmul.mubr.f32.gmra.mrb[0].mxu0 %v121
    %v189 = vpop.f32.mrb[0].mxu0
    %v190 = vadd.f32 %v102, %v189
    %v191 = vpop.f32.mrb[0].mxu0
    %v192 = vadd.f32 %v106, %v191
    %193 = vdwg.mxu0
    %194 = vmatprep.subr.mxu0 %v84
    %195 = vmatpush1.msra.mxu0 %v83
    %196 = vmatprep.subr.mxu0 %v88
    %197 = vmatpush1.msra.mxu0 %v87
    %198 = vmatprep.subr.mxu0 %v92
    %199 = vmatpush1.msra.mxu0 %v91
    %200 = vmatprep.subr.mxu0 %v96
    %201 = vmatpush1.msra.mxu0 %v95
    %202 = vmatprep.subr.mxu0 0.0
    %203 = vmatpush1.msra.mxu0 0.0
    %204 = vmatprep.subr.mxu0 0.0
    %205 = vmatpush1.msra.mxu0 0.0
    %206 = vmatprep.subr.mxu0 0.0
    %207 = vmatpush1.msra.mxu0 0.0
    %208 = vmatprep.subr.mxu0 0.0
    %209 = vmatpush1.msra.mxu0 0.0
    %210 = vmatprep.subr.mxu0 0.0
    %211 = vmatpush1.msra.mxu0 0.0
    %212 = vmatprep.subr.mxu0 0.0
    %213 = vmatpush1.msra.mxu0 0.0
    %214 = vmatprep.subr.mxu0 0.0
    %215 = vmatpush1.msra.mxu0 0.0
    %216 = vmatprep.subr.mxu0 0.0
    %217 = vmatpush1.msra.mxu0 0.0
    %218 = vmatprep.subr.mxu0 0.0
    %219 = vmatpush1.msra.mxu0 0.0
    %220 = vmatprep.subr.mxu0 0.0
    %221 = vmatpush1.msra.mxu0 0.0
    %222 = vmatprep.subr.mxu0 0.0
    %223 = vmatpush1.msra.mxu0 0.0
    %224 = vmatprep.subr.mxu0 0.0
    %225 = vmatpush1.msra.mxu0 0.0
    %226 = vmatprep.subr.mxu0 0.0
    %227 = vmatpush1.msra.mxu0 0.0
    %228 = vmatprep.subr.mxu0 0.0
    %229 = vmatpush1.msra.mxu0 0.0
    %230 = vmatprep.subr.mxu0 0.0
    %231 = vmatpush1.msra.mxu0 0.0
    %232 = vmatprep.subr.mxu0 0.0
    %233 = vmatpush1.msra.mxu0 0.0
    %234 = vmatprep.subr.mxu0 0.0
    %235 = vmatpush1.msra.mxu0 0.0
    %236 = vmatprep.subr.mxu0 0.0
    %237 = vmatpush1.msra.mxu0 0.0
    %238 = vmatprep.subr.mxu0 0.0
    %239 = vmatpush1.msra.mxu0 0.0
    %240 = vmatprep.subr.mxu0 0.0
    %241 = vmatpush1.msra.mxu0 0.0
    %242 = vmatprep.subr.mxu0 0.0
    %243 = vmatpush1.msra.mxu0 0.0
    %244 = vmatprep.subr.mxu0 0.0
    %245 = vmatpush1.msra.mxu0 0.0
    %246 = vmatprep.subr.mxu0 0.0
    %247 = vmatpush1.msra.mxu0 0.0
    %248 = vmatprep.subr.mxu0 0.0
    %249 = vmatpush1.msra.mxu0 0.0
    %250 = vmatprep.subr.mxu0 0.0
    %251 = vmatpush1.msra.mxu0 0.0
    %252 = vmatprep.subr.mxu0 0.0
    %253 = vmatpush1.msra.mxu0 0.0
    %254 = vmatprep.subr.mxu0 0.0
    %255 = vmatpush1.msra.mxu0 0.0
    %256 = vmatprep.subr.mxu0 0.0
    %257 = vmatpush1.msra.mxu0 0.0
    %258 = vmatprep.mubr.f32.mxu0 0.0
    %259 = vmatmul.mubr.f32.gmra.mrb[0].mxu0 %v121
    %v260 = vpop.f32.mrb[0].mxu0
    %v261 = vadd.f32 %v110, %v260
    %v262 = vpop.f32.mrb[0].mxu0
    %v263 = vadd.f32 %v114, %v262
    %264 = vdwg.mxu0
    %v265 = vmax.f32 %v190, 0.0
    %v266 = vmax.f32 %v192, 0.0
    %v267 = vmax.f32 %v261, 0.0
    %v268 = vmax.f32 %v263, 0.0
    %v269 = vld [vmem:[#allocation7] sm:$0xff]
    %v270 = vld [vmem:[#allocation7 + $0x8] sm:$0xff]
    %v271 = vld [vmem:[#allocation7 + $0x10] sm:$0xff]
    %v272 = vld [vmem:[#allocation7 + $0x18] sm:$0xff]
    %v273 = vld [vmem:[#allocation7 + $0x20] sm:$0xff]
    %v274 = vld [vmem:[#allocation7 + $0x28] sm:$0xff]
    %v275 = vld [vmem:[#allocation7 + $0x30] sm:$0xff]
    %v276 = vld [vmem:[#allocation7 + $0x38] sm:$0xff]
    %v277 = vld [vmem:[#allocation7 + $0x40] sm:$0xff]
    %v278 = vld [vmem:[#allocation7 + $0x48] sm:$0xff]
    %v279 = vld [vmem:[#allocation7 + $0x50] sm:$0xff]
    %v280 = vld [vmem:[#allocation7 + $0x58] sm:$0xff]
    %v281 = vld [vmem:[#allocation7 + $0x60] sm:$0xff]
    %v282 = vld [vmem:[#allocation7 + $0x68] sm:$0xff]
    %v283 = vld [vmem:[#allocation7 + $0x70] sm:$0xff]
    %v284 = vld [vmem:[#allocation7 + $0x78] sm:$0xff]
    %v285 = vld [vmem:[#allocation7 + $0x80] sm:$0xff]
    %v286 = vld [vmem:[#allocation7 + $0x88] sm:$0xff]
    %v287 = vld [vmem:[#allocation7 + $0x90] sm:$0xff]
    %v288 = vld [vmem:[#allocation7 + $0x98] sm:$0xff]
    %v289 = vld [vmem:[#allocation7 + $0xa0] sm:$0xff]
    %v290 = vld [vmem:[#allocation7 + $0xa8] sm:$0xff]
    %v291 = vld [vmem:[#allocation7 + $0xb0] sm:$0xff]
    %v292 = vld [vmem:[#allocation7 + $0xb8] sm:$0xff]
    %v293 = vld [vmem:[#allocation7 + $0xc0] sm:$0xff]
    %v294 = vld [vmem:[#allocation7 + $0xc8] sm:$0xff]
    %v295 = vld [vmem:[#allocation7 + $0xd0] sm:$0xff]
    %v296 = vld [vmem:[#allocation7 + $0xd8] sm:$0xff]
    %v297 = vld [vmem:[#allocation7 + $0xe0] sm:$0xff]
    %v298 = vld [vmem:[#allocation7 + $0xe8] sm:$0xff]
    %v299 = vld [vmem:[#allocation7 + $0xf0] sm:$0xff]
    %v300 = vld [vmem:[#allocation7 + $0xf8] sm:$0xff]
    %v301 = vld [vmem:[#allocation7 + $0x100] sm:$0xff]
    %v302 = vld [vmem:[#allocation7 + $0x108] sm:$0xff]
    %v303 = vld [vmem:[#allocation7 + $0x110] sm:$0xff]
    %v304 = vld [vmem:[#allocation7 + $0x118] sm:$0xff]
    %v305 = vld [vmem:[#allocation7 + $0x120] sm:$0xff]
    %v306 = vld [vmem:[#allocation7 + $0x128] sm:$0xff]
    %v307 = vld [vmem:[#allocation7 + $0x130] sm:$0xff]
    %v308 = vld [vmem:[#allocation7 + $0x138] sm:$0xff]
    %v309 = vld [vmem:[#allocation7 + $0x140] sm:$0xff]
    %v310 = vld [vmem:[#allocation7 + $0x148] sm:$0xff]
    %v311 = vld [vmem:[#allocation7 + $0x150] sm:$0xff]
    %v312 = vld [vmem:[#allocation7 + $0x158] sm:$0xff]
    %v313 = vld [vmem:[#allocation7 + $0x160] sm:$0xff]
    %v314 = vld [vmem:[#allocation7 + $0x168] sm:$0xff]
    %v315 = vld [vmem:[#allocation7 + $0x170] sm:$0xff]
    %v316 = vld [vmem:[#allocation7 + $0x178] sm:$0xff]
    %v317 = vld [vmem:[#allocation7 + $0x180] sm:$0xff]
    %v318 = vld [vmem:[#allocation7 + $0x188] sm:$0xff]
    %v319 = vld [vmem:[#allocation7 + $0x190] sm:$0xff]
    %v320 = vld [vmem:[#allocation7 + $0x198] sm:$0xff]
    %v321 = vld [vmem:[#allocation7 + $0x1a0] sm:$0xff]
    %v322 = vld [vmem:[#allocation7 + $0x1a8] sm:$0xff]
    %v323 = vld [vmem:[#allocation7 + $0x1b0] sm:$0xff]
    %v324 = vld [vmem:[#allocation7 + $0x1b8] sm:$0xff]
    %v325 = vld [vmem:[#allocation7 + $0x1c0] sm:$0xff]
    %v326 = vld [vmem:[#allocation7 + $0x1c8] sm:$0xff]
    %v327 = vld [vmem:[#allocation7 + $0x1d0] sm:$0xff]
    %v328 = vld [vmem:[#allocation7 + $0x1d8] sm:$0xff]
    %v329 = vld [vmem:[#allocation7 + $0x1e0] sm:$0xff]
    %v330 = vld [vmem:[#allocation7 + $0x1e8] sm:$0xff]
    %v331 = vld [vmem:[#allocation7 + $0x1f0] sm:$0xff]
    %v332 = vld [vmem:[#allocation7 + $0x1f8] sm:$0xff]
    %v333 = vld [vmem:[%s4] sm:$0x1]
    %v335 = vlaneseq
    %v336 = vshrl.u32 %v335, 7
    %v337 = vsub.s32 0, %v336
    %v338 = vrot.slane %v333, %v337
    %340 = vmatprep.subr.mxu0 0.0
    %341 = vmatpush1.msra.mxu0 %v269
    %342 = vmatprep.subr.mxu0 0.0
    %343 = vmatpush1.msra.mxu0 %v270
    %344 = vmatprep.subr.mxu0 0.0
    %345 = vmatpush1.msra.mxu0 %v271
    %346 = vmatprep.subr.mxu0 0.0
    %347 = vmatpush1.msra.mxu0 %v272
    %348 = vmatprep.subr.mxu0 0.0
    %349 = vmatpush1.msra.mxu0 %v273
    %350 = vmatprep.subr.mxu0 0.0
    %351 = vmatpush1.msra.mxu0 %v274
    %352 = vmatprep.subr.mxu0 0.0
    %353 = vmatpush1.msra.mxu0 %v275
    %354 = vmatprep.subr.mxu0 0.0
    %355 = vmatpush1.msra.mxu0 %v276
    %356 = vmatprep.subr.mxu0 0.0
    %357 = vmatpush1.msra.mxu0 %v277
    %358 = vmatprep.subr.mxu0 0.0
    %359 = vmatpush1.msra.mxu0 %v278
    %360 = vmatprep.subr.mxu0 0.0
    %361 = vmatpush1.msra.mxu0 %v279
    %362 = vmatprep.subr.mxu0 0.0
    %363 = vmatpush1.msra.mxu0 %v280
    %364 = vmatprep.subr.mxu0 0.0
    %365 = vmatpush1.msra.mxu0 %v281
    %366 = vmatprep.subr.mxu0 0.0
    %367 = vmatpush1.msra.mxu0 %v282
    %368 = vmatprep.subr.mxu0 0.0
    %369 = vmatpush1.msra.mxu0 %v283
    %370 = vmatprep.subr.mxu0 0.0
    %371 = vmatpush1.msra.mxu0 %v284
    %372 = vmatprep.subr.mxu0 0.0
    %373 = vmatpush1.msra.mxu0 %v285
    %374 = vmatprep.subr.mxu0 0.0
    %375 = vmatpush1.msra.mxu0 %v286
    %376 = vmatprep.subr.mxu0 0.0
    %377 = vmatpush1.msra.mxu0 %v287
    %378 = vmatprep.subr.mxu0 0.0
    %379 = vmatpush1.msra.mxu0 %v288
    %380 = vmatprep.subr.mxu0 0.0
    %381 = vmatpush1.msra.mxu0 %v289
    %382 = vmatprep.subr.mxu0 0.0
    %383 = vmatpush1.msra.mxu0 %v290
    %384 = vmatprep.subr.mxu0 0.0
    %385 = vmatpush1.msra.mxu0 %v291
    %386 = vmatprep.subr.mxu0 0.0
    %387 = vmatpush1.msra.mxu0 %v292
    %388 = vmatprep.subr.mxu0 0.0
    %389 = vmatpush1.msra.mxu0 %v293
    %390 = vmatprep.subr.mxu0 0.0
    %391 = vmatpush1.msra.mxu0 %v294
    %392 = vmatprep.subr.mxu0 0.0
    %393 = vmatpush1.msra.mxu0 %v295
    %394 = vmatprep.subr.mxu0 0.0
    %395 = vmatpush1.msra.mxu0 %v296
    %396 = vmatprep.subr.mxu0 0.0
    %397 = vmatpush1.msra.mxu0 %v297
    %398 = vmatprep.subr.mxu0 0.0
    %399 = vmatpush1.msra.mxu0 %v298
    %400 = vmatprep.subr.mxu0 0.0
    %401 = vmatpush1.msra.mxu0 %v299
    %402 = vmatprep.subr.mxu0 0.0
    %403 = vmatpush1.msra.mxu0 %v300
    %404 = vmatprep.mubr.f32.mxu0 %v266
    %405 = vmatmul.mubr.f32.gmra.mrb[0].mxu0 %v265
    %v406 = vpop.f32.mrb[0].mxu0
    %v407 = vadd.f32 %v338, %v406
    %v408 = vpop.f32.mrb[0].mxu0
    %409 = vdwg.mxu0
    %410 = vmatprep.subr.mxu0 0.0
    %411 = vmatpush1.msra.mxu0 %v301
    %412 = vmatprep.subr.mxu0 0.0
    %413 = vmatpush1.msra.mxu0 %v302
    %414 = vmatprep.subr.mxu0 0.0
    %415 = vmatpush1.msra.mxu0 %v303
    %416 = vmatprep.subr.mxu0 0.0
    %417 = vmatpush1.msra.mxu0 %v304
    %418 = vmatprep.subr.mxu0 0.0
    %419 = vmatpush1.msra.mxu0 %v305
    %420 = vmatprep.subr.mxu0 0.0
    %421 = vmatpush1.msra.mxu0 %v306
    %422 = vmatprep.subr.mxu0 0.0
    %423 = vmatpush1.msra.mxu0 %v307
    %424 = vmatprep.subr.mxu0 0.0
    %425 = vmatpush1.msra.mxu0 %v308
    %426 = vmatprep.subr.mxu0 0.0
    %427 = vmatpush1.msra.mxu0 %v309
    %428 = vmatprep.subr.mxu0 0.0
    %429 = vmatpush1.msra.mxu0 %v310
    %430 = vmatprep.subr.mxu0 0.0
    %431 = vmatpush1.msra.mxu0 %v311
    %432 = vmatprep.subr.mxu0 0.0
    %433 = vmatpush1.msra.mxu0 %v312
    %434 = vmatprep.subr.mxu0 0.0
    %435 = vmatpush1.msra.mxu0 %v313
    %436 = vmatprep.subr.mxu0 0.0
    %437 = vmatpush1.msra.mxu0 %v314
    %438 = vmatprep.subr.mxu0 0.0
    %439 = vmatpush1.msra.mxu0 %v315
    %440 = vmatprep.subr.mxu0 0.0
    %441 = vmatpush1.msra.mxu0 %v316
    %442 = vmatprep.subr.mxu0 0.0
    %443 = vmatpush1.msra.mxu0 %v317
    %444 = vmatprep.subr.mxu0 0.0
    %445 = vmatpush1.msra.mxu0 %v318
    %446 = vmatprep.subr.mxu0 0.0
    %447 = vmatpush1.msra.mxu0 %v319
    %448 = vmatprep.subr.mxu0 0.0
    %449 = vmatpush1.msra.mxu0 %v320
    %450 = vmatprep.subr.mxu0 0.0
    %451 = vmatpush1.msra.mxu0 %v321
    %452 = vmatprep.subr.mxu0 0.0
    %453 = vmatpush1.msra.mxu0 %v322
    %454 = vmatprep.subr.mxu0 0.0
    %455 = vmatpush1.msra.mxu0 %v323
    %456 = vmatprep.subr.mxu0 0.0
    %457 = vmatpush1.msra.mxu0 %v324
    %458 = vmatprep.subr.mxu0 0.0
    %459 = vmatpush1.msra.mxu0 %v325
    %460 = vmatprep.subr.mxu0 0.0
    %461 = vmatpush1.msra.mxu0 %v326
    %462 = vmatprep.subr.mxu0 0.0
    %463 = vmatpush1.msra.mxu0 %v327
    %464 = vmatprep.subr.mxu0 0.0
    %465 = vmatpush1.msra.mxu0 %v328
    %466 = vmatprep.subr.mxu0 0.0
    %467 = vmatpush1.msra.mxu0 %v329
    %468 = vmatprep.subr.mxu0 0.0
    %469 = vmatpush1.msra.mxu0 %v330
    %470 = vmatprep.subr.mxu0 0.0
    %471 = vmatpush1.msra.mxu0 %v331
    %472 = vmatprep.subr.mxu0 0.0
    %473 = vmatpush1.msra.mxu0 %v332
    %474 = vmatprep.mubr.f32.mxu0 %v268
    %475 = vmatmul.mubr.f32.gmra.mrb[0].mxu0 %v267
    %v476 = vpop.f32.mrb[0].mxu0
    %v477 = vadd.f32 %v407, %v476
    %v478 = vpop.f32.mrb[0].mxu0
    %479 = vdwg.mxu0
    %v480 = vmax.f32 %v477, 0.0
    %v481 = vld [vmem:[#allocation8] sm:$0xff]
    %v482 = vld [vmem:[#allocation8 + $0x8] sm:$0xff]
    %v483 = vld [vmem:[#allocation8 + $0x10] sm:$0xff]
    %v484 = vld [vmem:[#allocation8 + $0x18] sm:$0xff]
    %v485 = vld [vmem:[#allocation8 + $0x20] sm:$0xff]
    %v486 = vld [vmem:[#allocation8 + $0x28] sm:$0xff]
    %v487 = vld [vmem:[#allocation8 + $0x30] sm:$0xff]
    %v488 = vld [vmem:[#allocation8 + $0x38] sm:$0xff]
    %v489 = vld [vmem:[#allocation8 + $0x40] sm:$0xff]
    %v490 = vld [vmem:[#allocation8 + $0x48] sm:$0xff]
    %v491 = vld [vmem:[#allocation8 + $0x50] sm:$0xff]
    %v492 = vld [vmem:[#allocation8 + $0x58] sm:$0xff]
    %v493 = vld [vmem:[#allocation8 + $0x60] sm:$0xff]
    %v494 = vld [vmem:[#allocation8 + $0x68] sm:$0xff]
    %v495 = vld [vmem:[#allocation8 + $0x70] sm:$0xff]
    %v496 = vld [vmem:[#allocation8 + $0x78] sm:$0xff]
    %v497 = vld [vmem:[%s6] sm:$0x1]
    %v499 = vlaneseq
    %v500 = vshrl.u32 %v499, 7
    %v501 = vsub.s32 0, %v500
    %v502 = vrot.slane %v497, %v501
    %504 = vmatprep.subr.mxu0 0.0
    %505 = vmatpush1.msra.mxu0 %v481
    %506 = vmatprep.subr.mxu0 0.0
    %507 = vmatpush1.msra.mxu0 %v482
    %508 = vmatprep.subr.mxu0 0.0
    %509 = vmatpush1.msra.mxu0 %v483
    %510 = vmatprep.subr.mxu0 0.0
    %511 = vmatpush1.msra.mxu0 %v484
    %512 = vmatprep.subr.mxu0 0.0
    %513 = vmatpush1.msra.mxu0 %v485
    %514 = vmatprep.subr.mxu0 0.0
    %515 = vmatpush1.msra.mxu0 %v486
    %516 = vmatprep.subr.mxu0 0.0
    %517 = vmatpush1.msra.mxu0 %v487
    %518 = vmatprep.subr.mxu0 0.0
    %519 = vmatpush1.msra.mxu0 %v488
    %520 = vmatprep.subr.mxu0 0.0
    %521 = vmatpush1.msra.mxu0 %v489
    %522 = vmatprep.subr.mxu0 0.0
    %523 = vmatpush1.msra.mxu0 %v490
    %524 = vmatprep.subr.mxu0 0.0
    %525 = vmatpush1.msra.mxu0 %v491
    %526 = vmatprep.subr.mxu0 0.0
    %527 = vmatpush1.msra.mxu0 %v492
    %528 = vmatprep.subr.mxu0 0.0
    %529 = vmatpush1.msra.mxu0 %v493
    %530 = vmatprep.subr.mxu0 0.0
    %531 = vmatpush1.msra.mxu0 %v494
    %532 = vmatprep.subr.mxu0 0.0
    %533 = vmatpush1.msra.mxu0 %v495
    %534 = vmatprep.subr.mxu0 0.0
    %535 = vmatpush1.msra.mxu0 %v496
    %536 = vmatprep.subr.mxu0 0.0
    %537 = vmatpush1.msra.mxu0 0.0
    %538 = vmatprep.subr.mxu0 0.0
    %539 = vmatpush1.msra.mxu0 0.0
    %540 = vmatprep.subr.mxu0 0.0
    %541 = vmatpush1.msra.mxu0 0.0
    %542 = vmatprep.subr.mxu0 0.0
    %543 = vmatpush1.msra.mxu0 0.0
    %544 = vmatprep.subr.mxu0 0.0
    %545 = vmatpush1.msra.mxu0 0.0
    %546 = vmatprep.subr.mxu0 0.0
    %547 = vmatpush1.msra.mxu0 0.0
    %548 = vmatprep.subr.mxu0 0.0
    %549 = vmatpush1.msra.mxu0 0.0
    %550 = vmatprep.subr.mxu0 0.0
    %551 = vmatpush1.msra.mxu0 0.0
    %552 = vmatprep.subr.mxu0 0.0
    %553 = vmatpush1.msra.mxu0 0.0
    %554 = vmatprep.subr.mxu0 0.0
    %555 = vmatpush1.msra.mxu0 0.0
    %556 = vmatprep.subr.mxu0 0.0
    %557 = vmatpush1.msra.mxu0 0.0
    %558 = vmatprep.subr.mxu0 0.0
    %559 = vmatpush1.msra.mxu0 0.0
    %560 = vmatprep.subr.mxu0 0.0
    %561 = vmatpush1.msra.mxu0 0.0
    %562 = vmatprep.subr.mxu0 0.0
    %563 = vmatpush1.msra.mxu0 0.0
    %564 = vmatprep.subr.mxu0 0.0
    %565 = vmatpush1.msra.mxu0 0.0
    %566 = vmatprep.subr.mxu0 0.0
    %567 = vmatpush1.msra.mxu0 0.0
    %568 = vmatprep.mubr.f32.mxu0 0.0
    %569 = vmatmul.mubr.f32.gmra.mrb[0].mxu0 %v480
    %v570 = vpop.f32.mrb[0].mxu0
    %v571 = vadd.f32 %v502, %v570
    %v572 = vpop.f32.mrb[0].mxu0
    %573 = vdwg.mxu0
    %v574 = vtanh.pop %v571
    %575 = vst [vmem:[#allocation10] sm:$0xff] %v574
    // Predicated region
    $region46: #{tpu_custom_call.1} parent=1 // pred_check
      _
    $region47: #{tpu_custom_call.1} parent=1 // pred_check_branch
      %577 = sbr.rel (0) target = $region49
    $region48: #{tpu_custom_call.1} parent=1 // pred_region
      %s579 = ssub.s32 128, 128
      %580 = vsyncadd [#allocation4], %s579
      %s582 = sshll.u32 [#allocation10], 4
      %s583 = int_to_ptr.vmem [resolvable:$true] %s582
      %585 = dma.vmem_to_hbm [thread:$0]  %s583, 128, %s7, [#allocation4]
    $region49: #{tpu_custom_call.1} parent=1 // pred_fallthru
      _
    // Predicated region
    $region50: #{tpu_custom_call.1} parent=1 // pred_check
      _
    $region51: #{tpu_custom_call.1} parent=1 // pred_check_branch
      %587 = sbr.rel (0) target = $region53
    $region52: #{tpu_custom_call.1} parent=1 // pred_region
      %588 = dma.done [#allocation4], 128
    $region53: #{tpu_custom_call.1} parent=1 // pred_fallthru
      _
    %589 = vsyncpa [#allocation3], 1
    %590 = vsyncpa [#allocation6], 1
    %591 = vsyncpa [#allocation9], 1
    %592 = vsyncpa [#allocation4], 1

</llo_original>
